<compile_context>
chip_gen: v6e
topology: v6e:2x2x1
jax: 0.10.0
libtpu: 0.0.40
codegen_flags: <defaults>
</compile_context>

<pallas_src>
import functools
import math

import jax
import jax.numpy as jnp
from jax.experimental import pallas as pl
from jax.experimental.pallas import tpu as pltpu


def _round_up(v, m):
    return ((v + m - 1) // m) * m


def _nce_kernel(x_ref, o_ref, *, c_eps, tile_b, bsz, need_mask):
    """Per-tile partial of  sum_b log(P_pos_b) - sum_{b,j} log(x_bj + c + eps)."""
    x = x_ref[...].astype(jnp.float32)                        # (tile_b, K)

    if need_mask:
        # Global row index; rows >= bsz are padding of the last block.
        row = (jax.lax.broadcasted_iota(jnp.int32, x.shape, 0)
               + pl.program_id(0) * tile_b)
        valid = row < bsz
        denom = jnp.where(valid, x + jnp.float32(c_eps), jnp.float32(1.0))
        pos = jnp.where(valid[:, 0:1], x[:, 0:1], jnp.float32(1.0))
    else:
        denom = x + jnp.float32(c_eps)
        pos = x[:, 0:1]

    partial = jnp.sum(jnp.log(pos)) - jnp.sum(jnp.log(denom))  # scalar f32

    # Store the scalar partial at [0, 0, 0] of this tile's (1, 8, 128) output
    # block; all other entries are zero so a plain jnp.sum outside recovers it.
    sub = jax.lax.broadcasted_iota(jnp.int32, o_ref.shape, 1)
    lane = jax.lax.broadcasted_iota(jnp.int32, o_ref.shape, 2)
    o_ref[...] = jnp.where((sub == 0) & (lane == 0), partial, jnp.float32(0.0))


def nce_criterion(x, n_data, *, tile_b=None):
    """Pallas implementation of NCECriterion.forward. x: (bsz, m+1), positive."""
    bsz, k = x.shape
    m = k - 1
    pn = 1.0 / float(n_data)
    c = m * pn
    eps = 1e-07
    c_eps = c + eps

    itemsize = jnp.dtype(x.dtype).itemsize
    if tile_b is None:
        # ~2 MiB per input block (Pallas double-buffers it), capped at 1024 rows.
        tile_b = min(1024, max(8, (2 << 20) // max(1, k * itemsize)))
    tile_b = min(tile_b, _round_up(bsz, 8))
    tile_b = max(8, (tile_b // 8) * 8)

    num_tiles = pl.cdiv(bsz, tile_b)
    need_mask = (bsz % tile_b) != 0

    kernel = functools.partial(_nce_kernel, c_eps=c_eps, tile_b=tile_b,
                               bsz=bsz, need_mask=need_mask)

    # TODO(synk): if K is not a multiple of 128, lanes are wasted in every vreg;
    # a wrapper-side pad of the K axis to 128 would make the loads lane-dense.
    partials = pl.pallas_call(
        kernel,
        out_shape=jax.ShapeDtypeStruct((num_tiles, 8, 128), jnp.float32),
        grid=(num_tiles,),
        in_specs=[pl.BlockSpec((tile_b, k), lambda i: (i, 0))],
        out_specs=pl.BlockSpec((1, 8, 128), lambda i: (i, 0, 0)),
        compiler_params=pltpu.CompilerParams(
            dimension_semantics=("parallel",)),
        cost_estimate=pl.CostEstimate(
            flops=3 * bsz * k,
            transcendentals=bsz * (k + 1),
            bytes_accessed=bsz * k * itemsize + num_tiles * 8 * 128 * 4),
    )(x)

    # Compile-time constant: the m negative-column numerators contribute
    # bsz * m * log(c) to the total log-probability sum.
    const = bsz * m * math.log(c) if m > 0 else 0.0
    total = jnp.sum(partials) + jnp.float32(const)
    loss = -total / jnp.float32(bsz)
    # PyTorch returns shape (1,) (scalar sum broadcast with a (1,) sum).
    return loss.reshape(1)


def nce_criterion_ref(x, n_data):
    """Plain-JAX reference mirroring the PyTorch code path."""
    eps = 1e-07
    bsz = x.shape[0]
    m = x.shape[1] - 1
    pn = 1.0 / float(n_data)
    p_pos = x[:, 0]
    log_d1 = jnp.log(p_pos / (p_pos + m * pn + eps))
    p_neg = x[:, 1:]
    log_d0 = jnp.log((m * pn) / (p_neg + m * pn + eps))
    loss = -(jnp.sum(log_d1) + jnp.sum(log_d0.reshape(-1, 1), axis=0)) / bsz
    return loss


if __name__ == "__main__":
    key = jax.random.PRNGKey(0)
    n_data = 1000

    # Case 1: lane-dense K = 128 (1 positive + 127 negatives), bsz multiple of 8.
    x1 = jax.random.uniform(jax.random.fold_in(key, 0), (8, 128),
                            dtype=jnp.float32, minval=1e-3, maxval=1.0)
    out1 = jax.block_until_ready(nce_criterion(x1, n_data))
    ref1 = nce_criterion_ref(x1, n_data)
    assert out1.shape == (1,)
    assert jnp.allclose(out1, ref1, rtol=1e-5, atol=1e-4), (out1, ref1)

    # Case 2: multi-tile grid (3 tiles of 16 rows) with a ragged tail of 8 rows
    # -> exercises the parallel partial-sum path and the row mask.
    x2 = jax.random.uniform(jax.random.fold_in(key, 1), (40, 128),
                            dtype=jnp.float32, minval=1e-3, maxval=1.0)
    out2 = jax.block_until_ready(nce_criterion(x2, n_data, tile_b=16))
    ref2 = nce_criterion_ref(x2, n_data)
    assert out2.shape == (1,)
    assert jnp.allclose(out2, ref2, rtol=1e-5, atol=1e-4), (out2, ref2)

    print("KERNEL_OK")
</pallas_src>

<mosaic_0001>
module attributes {stable_mosaic.version = 11 : i64} {
  func.func @_nce_kernel(%arg0: i32, %arg1: memref<8x128xf32, #tpu.memory_space<vmem>>, %arg2: memref<1x8x128xf32, #tpu.memory_space<vmem>>) attributes {dimension_semantics = [#tpu.dimension_semantics<parallel>], iteration_bounds = array<i64: 1>, scalar_prefetch = 0 : i64, scratch_operands = 0 : i64, tpu.core_type = #tpu.core_type<tc>, window_params = [{transform_indices = @transform_0, window_bounds = array<i64: 8, 128>}, {transform_indices = @transform_1, window_bounds = array<i64: 1, 8, 128>}]} {
    %c0 = arith.constant 0 : index
    %c0_0 = arith.constant 0 : index
    %0 = vector.load %arg1[%c0, %c0_0] : memref<8x128xf32, #tpu.memory_space<vmem>>, vector<8x128xf32>
    %cst = arith.constant 0.127000093 : f32
    %1 = vector.broadcast %cst : f32 to vector<8x128xf32>
    %2 = arith.addf %0, %1 : vector<8x128xf32>
    %3 = vector.extract_strided_slice %0 {offsets = [0, 0], sizes = [8, 1], strides = [1, 1]} : vector<8x128xf32> to vector<8x1xf32>
    %4 = math.log %3 : vector<8x1xf32>
    %5 = vector.shape_cast %4 : vector<8x1xf32> to vector<1x8x1xf32>
    %cst_1 = arith.constant dense<0.000000e+00> : vector<1xf32>
    %6 = vector.multi_reduction <add>, %5, %cst_1 [1, 2] : vector<1x8x1xf32> to vector<1xf32>
    %7 = vector.shape_cast %6 : vector<1xf32> to vector<1x1x1xf32>
    %8 = vector.extract %7[0, 0, 0] : f32 from vector<1x1x1xf32>
    %9 = math.log %2 : vector<8x128xf32>
    %10 = vector.shape_cast %9 : vector<8x128xf32> to vector<1x8x128xf32>
    %cst_2 = arith.constant dense<0.000000e+00> : vector<1xf32>
    %11 = vector.multi_reduction <add>, %10, %cst_2 [1, 2] : vector<1x8x128xf32> to vector<1xf32>
    %12 = vector.shape_cast %11 : vector<1xf32> to vector<1x1x1xf32>
    %13 = vector.extract %12[0, 0, 0] : f32 from vector<1x1x1xf32>
    %14 = arith.subf %8, %13 : f32
    %15 = tpu.iota {dimensions = array<i32: 1>} : vector<1x8x128xi32>
    %16 = tpu.iota {dimensions = array<i32: 2>} : vector<1x8x128xi32>
    %c0_i32 = arith.constant 0 : i32
    %17 = vector.broadcast %c0_i32 : i32 to vector<1x8x128xi32>
    %18 = arith.cmpi eq, %15, %17 : vector<1x8x128xi32>
    %c0_i32_3 = arith.constant 0 : i32
    %19 = vector.broadcast %c0_i32_3 : i32 to vector<1x8x128xi32>
    %20 = arith.cmpi eq, %16, %19 : vector<1x8x128xi32>
    %21 = arith.andi %18, %20 : vector<1x8x128xi1>
    %cst_4 = arith.constant 0.000000e+00 : f32
    %22 = vector.broadcast %14 : f32 to vector<1x8x128xf32>
    %23 = vector.broadcast %cst_4 : f32 to vector<1x8x128xf32>
    %24 = arith.select %21, %22, %23 : vector<1x8x128xi1>, vector<1x8x128xf32>
    %c0_5 = arith.constant 0 : index
    %c0_6 = arith.constant 0 : index
    %c0_7 = arith.constant 0 : index
    %25 = vector.load %arg2[%c0_5, %c0_6, %c0_7] : memref<1x8x128xf32, #tpu.memory_space<vmem>>, vector<1x8x128xf32>
    tpu.vector_store %arg2[%c0_5, %c0_6, %c0_7], %24 {strides = array<i32>} : memref<1x8x128xf32, #tpu.memory_space<vmem>>, vector<1x8x128xf32>,
    return
  }
  func.func @transform_0(%arg0: i32) -> (i32, i32) {
    %c0_i32 = arith.constant 0 : i32
    %c0_i32_0 = arith.constant 0 : i32
    return %arg0, %c0_i32 : i32, i32
  }
  func.func @transform_1(%arg0: i32) -> (i32, i32, i32) {
    %c0_i32 = arith.constant 0 : i32
    %c0_i32_0 = arith.constant 0 : i32
    %c0_i32_1 = arith.constant 0 : i32
    return %arg0, %c0_i32, %c0_i32_0 : i32, i32, i32
  }
}

</mosaic_0001>

<llo_original>
// kernel: tpu_custom_call.1
$region0: #{tpu_custom_call.1}
  #allocation0 [shape = 'u32[]', space=smem, size = 0x4, offset = 0x4, fixed_abs, tag = 'smem constant byte address 0x4 - core index']
  #allocation1 [shape = 'u32[144,128]{1,0:T(1,128)}', space=vmem, size = 0x12000, scoped, tag = 'internal scratch']
  %s0 = inlined_call_operand.hbm [shape: f32[8,128], index: 0, kind: input, shape index: {}]
  %s1 = inlined_call_operand.hbm [shape: f32[1,8,128], index: 1, kind: output, shape index: {}]
  %s2 = sld [smem:[#allocation0]]
  $region18: #{tpu_custom_call.1} parent=0
    _
  %s4 = ssub.s32 1, %s2
  %s5 = scalar_select 0, %s4, %s2
  $region1: #{tpu_custom_call.1} parent=0
    #allocation2 [shape = 'u8[4096]{0}', space=vmem, size = 0x1000, scoped, tag = 'input window, operand 0, single buffered']
    #allocation3 [shape = 's32[1]{0}', space=sflag, size = 0x4, scoped, tag = 'scoped memory for tpu_custom_call.1']
    #allocation4 [shape = 's32[1]{0}', space=sflag, size = 0x4, scoped, tag = 'scoped memory for tpu_custom_call.1']
    #allocation5 [shape = 'u8[4096]{0}', space=vmem, size = 0x1000, scoped, tag = 'output window, operand 0, single buffered']
    %6 = vsyncpa [#allocation3], 0
    %7 = vsyncpa [#allocation4], 0
    // Predicated region
    $region2: #{tpu_custom_call.1} parent=1 // pred_check
      _
    $region3: #{tpu_custom_call.1} parent=1 // pred_check_branch
      %9 = sbr.rel (0) target = $region5
    $region4: #{tpu_custom_call.1} parent=1 // pred_region
      %s11 = ssub.s32 128, 128
      %12 = vsyncadd [#allocation3], %s11
      %s14 = sshll.u32 [#allocation2], 4
      %s15 = int_to_ptr.vmem [resolvable:$true] %s14
      %17 = dma.hbm_to_vmem [thread:$0]  %s0, 128, %s15, [#allocation3]
    $region5: #{tpu_custom_call.1} parent=1 // pred_fallthru
      _
    // Predicated region
    $region6: #{tpu_custom_call.1} parent=1 // pred_check
      _
    $region7: #{tpu_custom_call.1} parent=1 // pred_check_branch
      %19 = sbr.rel (0) target = $region9
    $region8: #{tpu_custom_call.1} parent=1 // pred_region
      %20 = dma.done [#allocation3], 128
    $region9: #{tpu_custom_call.1} parent=1 // pred_fallthru
      _
    %v21 = vld [vmem:[#allocation2] sm:$0xff]
    %v22 = vadd.f32 %v21, 0.1270001
    %v23 = vlog2.pop %v21
    %v24 = vmul.f32 %v23, 0.6931472
    %vm25 = vcmask 7168
    %v26 = vsel %vm25, %v24, 0.0
    %27 = vadd.xlane.f32.xlu0 %v26
    %v28 = vpop.xlane.xlu0 %27
    %v29 = vrot.slane %v28, 4
    %v30 = vadd.f32 %v28, %v29
    %v31 = vrot.slane %v30, 2
    %v32 = vadd.f32 %v30, %v31
    %v33 = vrot.slane %v32, 1
    %v34 = vadd.f32 %v32, %v33
    %s35 = vtos %v34
    %v36 = vlog2.pop %v22
    %v37 = vmul.f32 %v36, 0.6931472
    %38 = vadd.xlane.f32.xlu0 %v37
    %v39 = vpop.xlane.xlu0 %38
    %v40 = vrot.slane %v39, 4
    %v41 = vadd.f32 %v39, %v40
    %v42 = vrot.slane %v41, 2
    %v43 = vadd.f32 %v41, %v42
    %v44 = vrot.slane %v43, 1
    %v45 = vadd.f32 %v43, %v44
    %s46 = vtos %v45
    %s47 = ssub.f32 %s35, %s46
    %v48 = vlaneseq
    %v49 = vshrl.u32 %v48, 7
    %v50 = vlaneseq
    %v51 = vand.u32 %v50, 127
    %vm52 = vcmp.eq.s32.totalorder %v49, 0
    %vm53 = vcmp.eq.s32.totalorder %v51, 0
    %vm54 = vmand %vm52, %vm53
    %v55 = vstv %s47
    %v56 = vsel %vm54, %v55, 0.0
    %57 = vst [vmem:[#allocation5] sm:$0xff] %v56
    // Predicated region
    $region10: #{tpu_custom_call.1} parent=1 // pred_check
      _
    $region11: #{tpu_custom_call.1} parent=1 // pred_check_branch
      %59 = sbr.rel (0) target = $region13
    $region12: #{tpu_custom_call.1} parent=1 // pred_region
      %s61 = ssub.s32 128, 128
      %62 = vsyncadd [#allocation4], %s61
      %s64 = sshll.u32 [#allocation5], 4
      %s65 = int_to_ptr.vmem [resolvable:$true] %s64
      %67 = dma.vmem_to_hbm [thread:$0]  %s65, 128, %s1, [#allocation4]
    $region13: #{tpu_custom_call.1} parent=1 // pred_fallthru
      _
    // Predicated region
    $region14: #{tpu_custom_call.1} parent=1 // pred_check
      _
    $region15: #{tpu_custom_call.1} parent=1 // pred_check_branch
      %69 = sbr.rel (0) target = $region17
    $region16: #{tpu_custom_call.1} parent=1 // pred_region
      %70 = dma.done [#allocation4], 128
    $region17: #{tpu_custom_call.1} parent=1 // pred_fallthru
      _
    %71 = vsyncpa [#allocation3], 1
    %72 = vsyncpa [#allocation4], 1

</llo_original>
